<compile_context>
chip_gen: v6e
topology: v6e:2x2x1
jax: 0.10.0
libtpu: 0.0.40
codegen_flags: <defaults>
</compile_context>

<pallas_src>
import functools

import jax
import jax.numpy as jnp
from jax.experimental import pallas as pl
from jax.experimental.pallas import tpu as pltpu

_EPS = 1e-8
_LANES = 128
_MAX_TILE_N = 65536  # (3, 65536) f32 = 768 KiB per buffered input block


def _round_up(x, m):
    return ((x + m - 1) // m) * m


def _cosine_gaze_loss_kernel(pred_ref, tgt_ref, out_ref, acc_ref, *,
                             n_true, tile_n, d, needs_mask):
    """One grid step processes a lane-dense (D, TILE_N) slab of gaze vectors."""
    i = pl.program_id(0)

    # The (1, TILE_N) accumulator is resident across the (single, reduction)
    # grid axis: zero it on the first step, reduce it on the last.
    @pl.when(i == 0)
    def _init():
        acc_ref[...] = jnp.zeros_like(acc_ref)

    p = pred_ref[...].astype(jnp.float32)  # (D, TILE_N)
    t = tgt_ref[...].astype(jnp.float32)

    # Unrolled sublane accumulation: pure VALU adds, no cross-lane XLU reduce.
    ss_p = p[0:1, :] * p[0:1, :]
    ss_t = t[0:1, :] * t[0:1, :]
    dot = p[0:1, :] * t[0:1, :]
    for r in range(1, d):
        pr = p[r:r + 1, :]
        tr = t[r:r + 1, :]
        ss_p = ss_p + pr * pr
        ss_t = ss_t + tr * tr
        dot = dot + pr * tr

    # F.normalize(x, eps) followed by cosine_similarity's re-normalization is,
    # for rows with ||x|| >= eps, exactly dot(p, t)/(max(||p||,eps)*max(||t||,eps)),
    # and rsqrt(max(sumsq, eps^2)) == 1 / max(sqrt(sumsq), eps).
    # TODO(synk): degenerate rows with ||x|| < 1e-8 differ slightly from PyTorch's
    # second (re-)normalization clamp; non-degenerate rows are equivalent.
    eps2 = jnp.float32(_EPS * _EPS)
    inv_p = jax.lax.rsqrt(jnp.maximum(ss_p, eps2))   # EUP slot (effectively free)
    inv_t = jax.lax.rsqrt(jnp.maximum(ss_t, eps2))
    sim = dot * inv_p * inv_t                        # (1, TILE_N)

    contrib = jnp.float32(1.0) - sim
    if needs_mask:  # static: only compiled when the wrapper zero-padded N
        col = jax.lax.broadcasted_iota(jnp.int32, sim.shape, 1) + i * tile_n
        contrib = jnp.where(col < n_true, contrib, jnp.float32(0.0))

    acc_ref[...] += contrib  # VALU-only per-step accumulation

    @pl.when(i == pl.num_programs(0) - 1)
    def _finalize():
        out_ref[0, 0] = jnp.sum(acc_ref[...]) * jnp.float32(1.0 / n_true)


def cosine_gaze_loss(output, target, *, max_tile_n=_MAX_TILE_N):
    """output: dict with 'cartesian' -> (N, D) array; target: (N, D) array."""
    if "cartesian" in output:
        pred = output["cartesian"]
    elif "spherical" in output:
        # TODO(synk): spherical2cartesial is not defined in the reference module;
        # only the cartesian branch is implemented.
        raise NotImplementedError("spherical branch not implemented")
    else:
        raise ValueError("Output must contain either cartesian or spherical keys")

    assert pred.shape == target.shape and pred.ndim == 2
    n, d = pred.shape

    # Lane-dense relayout: (N, D) -> (D, N). Keep native HBM dtype; cast in-kernel.
    pred_t = jnp.transpose(pred)
    tgt_t = jnp.transpose(target)

    tile_n = min(max_tile_n, _round_up(n, _LANES))
    n_pad = _round_up(n, tile_n)
    needs_mask = n_pad != n
    if needs_mask:
        pred_t = jnp.pad(pred_t, ((0, 0), (0, n_pad - n)))
        tgt_t = jnp.pad(tgt_t, ((0, 0), (0, n_pad - n)))

    grid = (n_pad // tile_n,)
    kernel = functools.partial(
        _cosine_gaze_loss_kernel,
        n_true=n, tile_n=tile_n, d=d, needs_mask=needs_mask,
    )

    # TODO(synk): optional v7x 2-TensorCore split (leading 'parallel' axis with
    # per-core partial outputs) not included; single reduction axis kept simple.
    loss = pl.pallas_call(
        kernel,
        out_shape=jax.ShapeDtypeStruct((1, 1), jnp.float32),
        grid_spec=pltpu.PrefetchScalarGridSpec(
            num_scalar_prefetch=0,
            grid=grid,
            in_specs=[
                pl.BlockSpec((d, tile_n), lambda i: (0, i)),
                pl.BlockSpec((d, tile_n), lambda i: (0, i)),
            ],
            out_specs=pl.BlockSpec(memory_space=pltpu.SMEM),
            scratch_shapes=[pltpu.VMEM((1, tile_n), jnp.float32)],
        ),
        compiler_params=pltpu.CompilerParams(
            dimension_semantics=("arbitrary",),
            vmem_limit_bytes=32 * 1024 * 1024,
        ),
    )(pred_t, tgt_t)
    return loss[0, 0]


def _reference_loss(pred, target):
    # Pure-JAX reference mirroring the PyTorch semantics.
    def normalize(x):
        nrm = jnp.maximum(jnp.linalg.norm(x, axis=1, keepdims=True), _EPS)
        return x / nrm

    pv, tv = normalize(pred), normalize(target)
    dot = jnp.sum(pv * tv, axis=1)
    denom = jnp.maximum(jnp.linalg.norm(pv, axis=1), _EPS) * jnp.maximum(
        jnp.linalg.norm(tv, axis=1), _EPS
    )
    return jnp.mean(1.0 - dot / denom)


if __name__ == "__main__":
    key = jax.random.PRNGKey(0)
    k1, k2, k3, k4 = jax.random.split(key, 4)

    # Case 1: small, single tile (8 gaze vectors, 3-D cartesian).
    N, D = 8, 3
    pred = jax.random.normal(k1, (N, D), dtype=jnp.float32)
    target = jax.random.normal(k2, (N, D), dtype=jnp.float32)
    loss = jax.block_until_ready(cosine_gaze_loss({"cartesian": pred}, target))
    ref = _reference_loss(pred, target)
    assert jnp.allclose(loss, ref, atol=1e-5, rtol=1e-5), (loss, ref)

    # Case 2: N not a multiple of the tile, multi-tile grid (exercises masking
    # and the resident VMEM accumulator across grid steps).
    N2 = 200
    pred2 = jax.random.normal(k3, (N2, D), dtype=jnp.float32)
    target2 = jax.random.normal(k4, (N2, D), dtype=jnp.float32)
    loss2 = jax.block_until_ready(
        cosine_gaze_loss({"cartesian": pred2}, target2, max_tile_n=128)
    )
    ref2 = _reference_loss(pred2, target2)
    assert jnp.allclose(loss2, ref2, atol=1e-5, rtol=1e-5), (loss2, ref2)

    print("KERNEL_OK")
</pallas_src>

<mosaic_0001>
module attributes {stable_mosaic.version = 11 : i64} {
  func.func @_cosine_gaze_loss_kernel(%arg0: i32, %arg1: memref<3x128xf32, #tpu.memory_space<vmem>>, %arg2: memref<3x128xf32, #tpu.memory_space<vmem>>, %arg3: memref<1x1xf32, #tpu.memory_space<smem>>, %arg4: memref<1x128xf32, #tpu.memory_space<vmem>>) attributes {dimension_semantics = [#tpu.dimension_semantics<arbitrary>], iteration_bounds = array<i64: 1>, scalar_prefetch = 0 : i64, scratch_operands = 1 : i64, tpu.core_type = #tpu.core_type<tc>, window_params = [{transform_indices = @transform_0, window_bounds = array<i64: 3, 128>}, {transform_indices = @transform_1, window_bounds = array<i64: 3, 128>}, {transform_indices = @transform_2, window_bounds = array<i64: 1, 1>}]} {
    %c0_i32 = arith.constant 0 : i32
    %0 = arith.cmpi eq, %arg0, %c0_i32 : i32
    %1 = arith.extui %0 : i1 to i32
    %c0_i32_0 = arith.constant 0 : i32
    %2 = arith.cmpi ne, %1, %c0_i32_0 : i32
    scf.if %2 {
      %cst_13 = arith.constant 0.000000e+00 : f32
      %54 = vector.broadcast %cst_13 : f32 to vector<1x128xf32>
      %c0_14 = arith.constant 0 : index
      %c0_15 = arith.constant 0 : index
      %55 = vector.load %arg4[%c0_14, %c0_15] : memref<1x128xf32, #tpu.memory_space<vmem>>, vector<1x128xf32>
      tpu.vector_store %arg4[%c0_14, %c0_15], %54 {strides = array<i32>} : memref<1x128xf32, #tpu.memory_space<vmem>>, vector<1x128xf32>,
    } else {
    }
    %c0 = arith.constant 0 : index
    %c0_1 = arith.constant 0 : index
    %3 = vector.load %arg1[%c0, %c0_1] : memref<3x128xf32, #tpu.memory_space<vmem>>, vector<3x128xf32>
    %c0_2 = arith.constant 0 : index
    %c0_3 = arith.constant 0 : index
    %4 = vector.load %arg2[%c0_2, %c0_3] : memref<3x128xf32, #tpu.memory_space<vmem>>, vector<3x128xf32>
    %5 = vector.extract_strided_slice %3 {offsets = [0, 0], sizes = [1, 128], strides = [1, 1]} : vector<3x128xf32> to vector<1x128xf32>
    %6 = vector.extract_strided_slice %3 {offsets = [0, 0], sizes = [1, 128], strides = [1, 1]} : vector<3x128xf32> to vector<1x128xf32>
    %7 = arith.mulf %5, %6 : vector<1x128xf32>
    %8 = vector.extract_strided_slice %4 {offsets = [0, 0], sizes = [1, 128], strides = [1, 1]} : vector<3x128xf32> to vector<1x128xf32>
    %9 = vector.extract_strided_slice %4 {offsets = [0, 0], sizes = [1, 128], strides = [1, 1]} : vector<3x128xf32> to vector<1x128xf32>
    %10 = arith.mulf %8, %9 : vector<1x128xf32>
    %11 = vector.extract_strided_slice %3 {offsets = [0, 0], sizes = [1, 128], strides = [1, 1]} : vector<3x128xf32> to vector<1x128xf32>
    %12 = vector.extract_strided_slice %4 {offsets = [0, 0], sizes = [1, 128], strides = [1, 1]} : vector<3x128xf32> to vector<1x128xf32>
    %13 = arith.mulf %11, %12 : vector<1x128xf32>
    %14 = vector.extract_strided_slice %3 {offsets = [1, 0], sizes = [1, 128], strides = [1, 1]} : vector<3x128xf32> to vector<1x128xf32>
    %15 = vector.extract_strided_slice %4 {offsets = [1, 0], sizes = [1, 128], strides = [1, 1]} : vector<3x128xf32> to vector<1x128xf32>
    %16 = arith.mulf %14, %14 : vector<1x128xf32>
    %17 = arith.addf %7, %16 : vector<1x128xf32>
    %18 = arith.mulf %15, %15 : vector<1x128xf32>
    %19 = arith.addf %10, %18 : vector<1x128xf32>
    %20 = arith.mulf %14, %15 : vector<1x128xf32>
    %21 = arith.addf %13, %20 : vector<1x128xf32>
    %22 = vector.extract_strided_slice %3 {offsets = [2, 0], sizes = [1, 128], strides = [1, 1]} : vector<3x128xf32> to vector<1x128xf32>
    %23 = vector.extract_strided_slice %4 {offsets = [2, 0], sizes = [1, 128], strides = [1, 1]} : vector<3x128xf32> to vector<1x128xf32>
    %24 = arith.mulf %22, %22 : vector<1x128xf32>
    %25 = arith.addf %17, %24 : vector<1x128xf32>
    %26 = arith.mulf %23, %23 : vector<1x128xf32>
    %27 = arith.addf %19, %26 : vector<1x128xf32>
    %28 = arith.mulf %22, %23 : vector<1x128xf32>
    %29 = arith.addf %21, %28 : vector<1x128xf32>
    %cst = arith.constant 1.000000e-16 : f32
    %30 = vector.broadcast %cst : f32 to vector<1x128xf32>
    %31 = arith.maximumf %25, %30 : vector<1x128xf32>
    %32 = math.rsqrt %31 : vector<1x128xf32>
    %cst_4 = arith.constant 1.000000e-16 : f32
    %33 = vector.broadcast %cst_4 : f32 to vector<1x128xf32>
    %34 = arith.maximumf %27, %33 : vector<1x128xf32>
    %35 = math.rsqrt %34 : vector<1x128xf32>
    %36 = arith.mulf %29, %32 : vector<1x128xf32>
    %37 = arith.mulf %36, %35 : vector<1x128xf32>
    %cst_5 = arith.constant 1.000000e+00 : f32
    %38 = vector.broadcast %cst_5 : f32 to vector<1x128xf32>
    %39 = arith.subf %38, %37 : vector<1x128xf32>
    %40 = tpu.iota {dimensions = array<i32: 1>} : vector<1x128xi32>
    %c128_i32 = arith.constant 128 : i32
    %41 = arith.muli %arg0, %c128_i32 : i32
    %42 = vector.broadcast %41 : i32 to vector<1x128xi32>
    %43 = arith.addi %40, %42 : vector<1x128xi32>
    %c8_i32 = arith.constant 8 : i32
    %44 = vector.broadcast %c8_i32 : i32 to vector<1x128xi32>
    %45 = arith.cmpi slt, %43, %44 : vector<1x128xi32>
    %cst_6 = arith.constant 0.000000e+00 : f32
    %46 = vector.broadcast %cst_6 : f32 to vector<1x128xf32>
    %47 = arith.select %45, %39, %46 : vector<1x128xi1>, vector<1x128xf32>
    %c0_7 = arith.constant 0 : index
    %c0_8 = arith.constant 0 : index
    %48 = vector.load %arg4[%c0_7, %c0_8] : memref<1x128xf32, #tpu.memory_space<vmem>>, vector<1x128xf32>
    %49 = arith.addf %48, %47 : vector<1x128xf32>
    %c0_9 = arith.constant 0 : index
    %c0_10 = arith.constant 0 : index
    %50 = vector.load %arg4[%c0_9, %c0_10] : memref<1x128xf32, #tpu.memory_space<vmem>>, vector<1x128xf32>
    tpu.vector_store %arg4[%c0_9, %c0_10], %49 {strides = array<i32>} : memref<1x128xf32, #tpu.memory_space<vmem>>, vector<1x128xf32>,
    %c0_i32_11 = arith.constant 0 : i32
    %51 = arith.cmpi eq, %arg0, %c0_i32_11 : i32
    %52 = arith.extui %51 : i1 to i32
    %c0_i32_12 = arith.constant 0 : i32
    %53 = arith.cmpi ne, %52, %c0_i32_12 : i32
    scf.if %53 {
      %c0_13 = arith.constant 0 : index
      %c0_14 = arith.constant 0 : index
      %54 = vector.load %arg4[%c0_13, %c0_14] : memref<1x128xf32, #tpu.memory_space<vmem>>, vector<1x128xf32>
      %55 = vector.shape_cast %54 : vector<1x128xf32> to vector<1x1x128xf32>
      %cst_15 = arith.constant dense<0.000000e+00> : vector<1xf32>
      %56 = vector.multi_reduction <add>, %55, %cst_15 [1, 2] : vector<1x1x128xf32> to vector<1xf32>
      %57 = vector.shape_cast %56 : vector<1xf32> to vector<1x1x1xf32>
      %58 = vector.extract %57[0, 0, 0] : f32 from vector<1x1x1xf32>
      %cst_16 = arith.constant 1.250000e-01 : f32
      %59 = arith.mulf %58, %cst_16 : f32
      %c0_17 = arith.constant 0 : index
      %c0_18 = arith.constant 0 : index
      %60 = memref.load %arg3[%c0_17, %c0_18] : memref<1x1xf32, #tpu.memory_space<smem>>
      memref.store %59, %arg3[%c0_17, %c0_18] : memref<1x1xf32, #tpu.memory_space<smem>>
    } else {
    }
    return
  }
  func.func @transform_0(%arg0: i32) -> (i32, i32) {
    %c0_i32 = arith.constant 0 : i32
    %c0_i32_0 = arith.constant 0 : i32
    return %c0_i32, %arg0 : i32, i32
  }
  func.func @transform_1(%arg0: i32) -> (i32, i32) {
    %c0_i32 = arith.constant 0 : i32
    %c0_i32_0 = arith.constant 0 : i32
    return %c0_i32, %arg0 : i32, i32
  }
  func.func @transform_2(%arg0: i32) -> (i32, i32) {
    %c0_i32 = arith.constant 0 : i32
    %c0_i32_0 = arith.constant 0 : i32
    %c0_i32_1 = arith.constant 0 : i32
    return %c0_i32, %c0_i32_0 : i32, i32
  }
}

</mosaic_0001>

<llo_original>
// kernel: tpu_custom_call.1
$region0: #{tpu_custom_call.1}
  #allocation0 [shape = 'u32[]', space=smem, size = 0x4, offset = 0x4, fixed_abs, tag = 'smem constant byte address 0x4 - core index']
  #allocation1 [shape = 'u32[144,128]{1,0:T(1,128)}', space=vmem, size = 0x12000, scoped, tag = 'internal scratch']
  #allocation2 [shape = 'f32[1,128]{1,0:T(1,128)}', space=vmem, size = 0x200, scoped, tag = 'scratch operand']
  %s0 = inlined_call_operand.hbm [shape: f32[3,128], index: 0, kind: input, shape index: {}]
  %s1 = inlined_call_operand.hbm [shape: f32[3,128], index: 1, kind: input, shape index: {}]
  %s2 = inlined_call_operand.hbm [shape: f32[1,1], index: 2, kind: output, shape index: {}]
  %s3 = sld [smem:[#allocation0]]
  $region34: #{tpu_custom_call.1} parent=0
    _
  %s5 = ssub.s32 1, %s3
  %s6 = scalar_select 0, %s5, %s3
  $region1: #{tpu_custom_call.1} parent=0
    #allocation3 [shape = 'u8[2048]{0}', space=vmem, size = 0x800, scoped, tag = 'input window, operand 0, single buffered']
    #allocation4 [shape = 's32[1]{0}', space=sflag, size = 0x4, scoped, tag = 'scoped memory for tpu_custom_call.1']
    #allocation5 [shape = 's32[1]{0}', space=sflag, size = 0x4, scoped, tag = 'scoped memory for tpu_custom_call.1']
    #allocation6 [shape = 'u8[2048]{0}', space=vmem, size = 0x800, scoped, tag = 'input window, operand 1, single buffered']
    #allocation7 [shape = 's32[1]{0}', space=sflag, size = 0x4, scoped, tag = 'scoped memory for tpu_custom_call.1']
    #allocation8 [shape = 'u8[512]{0}', space=smem, size = 0x200, scoped, tag = 'output window, operand 0, single buffered']
    %7 = vsyncpa [#allocation4], 0
    %8 = vsyncpa [#allocation7], 0
    %9 = vsyncpa [#allocation5], 0
    // Predicated region
    $region2: #{tpu_custom_call.1} parent=1 // pred_check
      _
    $region3: #{tpu_custom_call.1} parent=1 // pred_check_branch
      %11 = sbr.rel (0) target = $region5
    $region4: #{tpu_custom_call.1} parent=1 // pred_region
      %s13 = ssub.s32 64, 64
      %14 = vsyncadd [#allocation4], %s13
      %s16 = sshll.u32 [#allocation3], 4
      %s17 = int_to_ptr.vmem [resolvable:$true] %s16
      %19 = dma.hbm_to_vmem [thread:$0]  %s0, 64, %s17, [#allocation4]
    $region5: #{tpu_custom_call.1} parent=1 // pred_fallthru
      _
    // Predicated region
    $region6: #{tpu_custom_call.1} parent=1 // pred_check
      _
    $region7: #{tpu_custom_call.1} parent=1 // pred_check_branch
      %21 = sbr.rel (0) target = $region9
    $region8: #{tpu_custom_call.1} parent=1 // pred_region
      %s23 = ssub.s32 64, 64
      %24 = vsyncadd [#allocation7], %s23
      %s26 = sshll.u32 [#allocation6], 4
      %s27 = int_to_ptr.vmem [resolvable:$true] %s26
      %29 = dma.hbm_to_vmem [thread:$0]  %s1, 64, %s27, [#allocation7]
    $region9: #{tpu_custom_call.1} parent=1 // pred_fallthru
      _
    // Predicated region
    $region10: #{tpu_custom_call.1} parent=1 // pred_check
      _
    $region11: #{tpu_custom_call.1} parent=1 // pred_check_branch
      %31 = sbr.rel (0) target = $region13
    $region12: #{tpu_custom_call.1} parent=1 // pred_region
      %32 = dma.done [#allocation4], 64
    $region13: #{tpu_custom_call.1} parent=1 // pred_fallthru
      _
    // Predicated region
    $region14: #{tpu_custom_call.1} parent=1 // pred_check
      _
    $region15: #{tpu_custom_call.1} parent=1 // pred_check_branch
      %34 = sbr.rel (0) target = $region17
    $region16: #{tpu_custom_call.1} parent=1 // pred_region
      %35 = dma.done [#allocation7], 64
    $region17: #{tpu_custom_call.1} parent=1 // pred_fallthru
      _
    %p36 = scmp.eq.s32.totalorder 0, 0
    // Predicated region
    $region18: #{tpu_custom_call.1} parent=1 // pred_check
      %p37 = pneg %p36
    $region19: #{tpu_custom_call.1} parent=1 // pred_check_branch
      %39 = sbr.rel (%p37) target = $region21
    $region20: #{tpu_custom_call.1} parent=1 // pred_region
      %40 = vst [vmem:[#allocation2] sm:$0x1] 0.0
    $region21: #{tpu_custom_call.1} parent=1 // pred_fallthru
      _
    %v41 = vld [vmem:[#allocation3] sm:$0x7]
    %v42 = vld [vmem:[#allocation6] sm:$0x7]
    %v43 = vmul.f32 %v41, %v41
    %v44 = vmul.f32 %v42, %v42
    %v45 = vmul.f32 %v41, %v42
    %v47 = vrot.slane %v43, 1
    %v49 = vadd.f32 %v43, %v47
    %v51 = vrot.slane %v44, 1
    %v53 = vadd.f32 %v44, %v51
    %v55 = vrot.slane %v45, 1
    %v57 = vadd.f32 %v45, %v55
    %v58 = vrot.slane %v43, 2
    %v60 = vadd.f32 %v49, %v58
    %v61 = vrot.slane %v44, 2
    %v63 = vadd.f32 %v53, %v61
    %v64 = vrot.slane %v45, 2
    %v66 = vadd.f32 %v57, %v64
    %v67 = vmax.f32 %v60, 1e-16
    %v68 = vrsqrt.pop %v67
    %v69 = vmax.f32 %v63, 1e-16
    %v70 = vrsqrt.pop %v69
    %v71 = vmul.f32 %v66, %v68
    %v72 = vmul.f32 %v71, %v70
    %v73 = vsub.f32 1.0, %v72
    %v74 = vlaneseq
    %v75 = vand.u32 %v74, 127
    %s76 = smul.u32 0, 128
    %v77 = vstv %s76
    %v78 = vadd.s32 %v75, %v77
    %vm79 = vcmp.lt.s32.totalorder %v78, 8
    %v80 = vsel %vm79, %v73, 0.0
    %v81 = vld [vmem:[#allocation2] sm:$0x1]
    %v82 = vadd.f32 %v81, %v80
    %83 = vst [vmem:[#allocation2] sm:$0x1] %v82
    // Predicated region
    $region22: #{tpu_custom_call.1} parent=1 // pred_check
      %p84 = pneg %p36
    $region23: #{tpu_custom_call.1} parent=1 // pred_check_branch
      %86 = sbr.rel (%p84) target = $region25
    $region24: #{tpu_custom_call.1} parent=1 // pred_region
      %v87 = vld [vmem:[#allocation2] sm:$0x1]
      %vm88 = vcmask 1040384
      %v89 = vsel %vm88, %v87, 0.0
      %90 = vadd.xlane.f32.xlu0 %v89
      %v91 = vpop.xlane.xlu0 %90
      %v92 = vrot.slane %v91, 4
      %v93 = vadd.f32 %v91, %v92
      %v94 = vrot.slane %v93, 2
      %v95 = vadd.f32 %v93, %v94
      %v96 = vrot.slane %v95, 1
      %v97 = vadd.f32 %v95, %v96
      %s98 = vtos %v97
      %s99 = smul.f32 %s98, 0.125
      %s100 = scalar_lea.smem [#allocation8], 0
      %101 = sst [smem:[%s100]] %s99
    $region25: #{tpu_custom_call.1} parent=1 // pred_fallthru
      _
    // Predicated region
    $region26: #{tpu_custom_call.1} parent=1 // pred_check
      _
    $region27: #{tpu_custom_call.1} parent=1 // pred_check_branch
      %103 = sbr.rel (0) target = $region29
    $region28: #{tpu_custom_call.1} parent=1 // pred_region
      %s105 = ssub.s32 16, 16
      %106 = vsyncadd [#allocation5], %s105
      %109 = dma.smem_to_hbm [#allocation8], 16, %s2, [#allocation5]
    $region29: #{tpu_custom_call.1} parent=1 // pred_fallthru
      _
    // Predicated region
    $region30: #{tpu_custom_call.1} parent=1 // pred_check
      _
    $region31: #{tpu_custom_call.1} parent=1 // pred_check_branch
      %111 = sbr.rel (0) target = $region33
    $region32: #{tpu_custom_call.1} parent=1 // pred_region
      %112 = dma.done [#allocation5], 16
    $region33: #{tpu_custom_call.1} parent=1 // pred_fallthru
      _
    %113 = sfence
    %114 = vsyncpa [#allocation4], 1
    %115 = vsyncpa [#allocation7], 1
    %116 = vsyncpa [#allocation5], 1

</llo_original>
